<compile_context>
chip_gen: v7x
topology: tpu7x:2x2x1
jax: 0.10.0
libtpu: 0.0.40
codegen_flags: <defaults>
</compile_context>

<pallas_src>
import functools

import jax
import jax.numpy as jnp
from jax.experimental import pallas as pl
from jax.experimental.pallas import tpu as pltpu


def _round_up(v, m):
    return ((v + m - 1) // m) * m


def _gated_attn_kernel(x_ref, wab_ref, bab_ref, wc_ref, bc_ref, a_out_ref):
    """One N-tile of the fused gated-attention forward."""
    d = wab_ref.shape[1] // 2
    c = a_out_ref.shape[1]

    # Single packed matmul: x @ [Wa | Wb]  (one MXU pass over x instead of two),
    # f32 accumulation regardless of the input compute dtype.
    ab = jnp.dot(x_ref[...], wab_ref[...], preferred_element_type=jnp.float32)
    ab = ab + bab_ref[...].astype(jnp.float32)

    a = jnp.tanh(ab[:, :d])            # attention_a: Linear + Tanh    (f32, EUP)
    b = jax.nn.sigmoid(ab[:, d:])      # attention_b: Linear + Sigmoid (f32, EUP)
    gated = (a * b).astype(wc_ref.dtype)

    # attention_c: Linear. Wc is lane-padded to 128 inside VMEM for a clean MXU
    # pass; only the real C columns are stored (no padded HBM writeback).
    out = jnp.dot(gated, wc_ref[...], preferred_element_type=jnp.float32)
    out = out + bc_ref[...].astype(jnp.float32)
    a_out_ref[...] = out[:, :c].astype(a_out_ref.dtype)


def attn_net_gated_forward(x, wa, ba, wb, bb, wc, bc, *,
                           tile_n=2048, compute_dtype=jnp.bfloat16):
    """Fused gated-attention forward. Returns (A, x) like the PyTorch module.

    x:  (N, L)
    wa: (L, D), ba: (1, D)     -- attention_a weights (pre-transposed, (in,out))
    wb: (L, D), bb: (1, D)     -- attention_b weights
    wc: (D, C), bc: (1, C)     -- attention_c weights
    A:  (N, C)

    compute_dtype: MXU input dtype (default bf16; accumulation / activations are
                   always f32). Pass jnp.float32 (or None) for full-precision.
    """
    N, L = x.shape
    D = wa.shape[1]
    C = wc.shape[1]

    # --- weight packing / padding (wrapper-side, one-time) -------------------
    wab = jnp.concatenate([wa, wb], axis=1)          # (L, 2D)
    bab = jnp.concatenate([ba, bb], axis=1)          # (1, 2D)  stays f32

    # Pad Wc/bc to 128 lanes only for the in-VMEM second matmul; the stored
    # output keeps the true C width.
    c_pad = _round_up(max(C, 128), 128)
    wc_p = jnp.pad(wc, ((0, 0), (0, c_pad - C)))
    bc_p = jnp.pad(bc, ((0, 0), (0, c_pad - C)))

    # bf16 compute path (default): halves the HBM read traffic of x and the
    # weights. For maximal benefit the caller should hand x in already as bf16
    # (then no cast pass is emitted here).
    if compute_dtype is not None and x.dtype != compute_dtype:
        x_in = x.astype(compute_dtype)
    else:
        x_in = x
    if compute_dtype is not None:
        wab = wab.astype(compute_dtype)
        wc_p = wc_p.astype(compute_dtype)

    # --- tiling over N (multiple of 256: MXU block / 16-sublane bf16 multiple) -
    row_align = 256
    tile_n = min(tile_n, _round_up(N, row_align))
    tile_n = _round_up(tile_n, row_align)
    n_pad = _round_up(N, tile_n)
    if n_pad != N:
        x_in = jnp.pad(x_in, ((0, n_pad - N), (0, 0)))
    grid = (n_pad // tile_n,)

    # --- VMEM budget -----------------------------------------------------------
    in_itemsize = jnp.dtype(x_in.dtype).itemsize
    out_itemsize = jnp.dtype(x.dtype).itemsize
    weight_bytes = (wab.size * in_itemsize + wc_p.size * in_itemsize
                    + bab.size * 4 + bc_p.size * 4)
    est_bytes = (
        2 * tile_n * L * in_itemsize        # x tiles (double-buffered)
        + 2 * tile_n * C * out_itemsize     # A tiles (double-buffered)
        + 2 * weight_bytes                  # constant-index specs still get 2 buffers
        + tile_n * 2 * D * 4                # ab   (f32 intermediate)
        + 2 * tile_n * D * 4                # a, b (f32 intermediates)
        + tile_n * D * in_itemsize          # gated
        + tile_n * c_pad * 4                # padded f32 out before the column slice
    )
    try:
        phys_vmem = int(pltpu.get_tpu_info().vmem_capacity_bytes)
    except Exception:
        phys_vmem = 64 * 1024 * 1024        # conservative default (v7x per-TC size)
    vmem_cap = (phys_vmem * 3) // 4         # headroom for Mosaic scratch/semaphores
    vmem_limit = int(min(max(32 * 1024 * 1024, (est_bytes * 3) // 2), vmem_cap))

    # Advisory cost so XLA schedules surrounding ops around the custom call.
    cost = pl.CostEstimate(
        flops=int(2 * n_pad * L * 2 * D + 2 * n_pad * D * c_pad),
        transcendentals=int(2 * n_pad * D),
        bytes_accessed=int(x_in.size * in_itemsize + weight_bytes
                           + n_pad * C * out_itemsize),
    )

    resident = lambda shape: pl.BlockSpec(shape, lambda i: (0, 0))

    A_pad = pl.pallas_call(
        _gated_attn_kernel,
        out_shape=jax.ShapeDtypeStruct((n_pad, C), x.dtype),
        grid=grid,
        in_specs=[
            # NOTE(v5e): if xprof shows exposed x-DMA after the bf16 switch, add
            # pipeline_mode=pl.Buffered(3) to this spec to deepen the x pipeline.
            pl.BlockSpec((tile_n, L), lambda i: (i, 0)),   # x tile per grid step
            resident((L, 2 * D)),                          # packed Wa|Wb
            resident((1, 2 * D)),                          # packed ba|bb (f32)
            resident((D, c_pad)),                          # lane-padded Wc
            resident((1, c_pad)),                          # lane-padded bc (f32)
        ],
        out_specs=pl.BlockSpec((tile_n, C), lambda i: (i, 0)),
        compiler_params=pltpu.CompilerParams(
            dimension_semantics=("parallel",),
            vmem_limit_bytes=vmem_limit,
        ),
        cost_estimate=cost,
    )(x_in, wab, bab, wc_p, bc_p)

    A = A_pad if n_pad == N else A_pad[:N]
    return A, x


def _reference(x, wa, ba, wb, bb, wc, bc):
    a = jnp.tanh(x @ wa + ba)
    b = jax.nn.sigmoid(x @ wb + bb)
    return (a * b) @ wc + bc


if __name__ == "__main__":
    # Small shapes consistent with the module's Linear(L, D) / Linear(D, n_classes).
    N, L, D, C = 8, 32, 16, 1

    key = jax.random.PRNGKey(0)
    kx, kwa, kba, kwb, kbb, kwc, kbc = jax.random.split(key, 7)

    x = jax.random.normal(kx, (N, L), dtype=jnp.float32)
    # Deterministic parameter init (synthetic weights, not a checkpoint load).
    wa = jax.random.normal(kwa, (L, D), dtype=jnp.float32) * 0.1
    ba = jax.random.normal(kba, (1, D), dtype=jnp.float32) * 0.1
    wb = jax.random.normal(kwb, (L, D), dtype=jnp.float32) * 0.1
    bb = jax.random.normal(kbb, (1, D), dtype=jnp.float32) * 0.1
    wc = jax.random.normal(kwc, (D, C), dtype=jnp.float32) * 0.1
    bc = jax.random.normal(kbc, (1, C), dtype=jnp.float32) * 0.1

    A_ref = _reference(x, wa, ba, wb, bb, wc, bc)

    # Default path: bf16 compute, f32 accumulation (loose tolerance vs f32 ref).
    fwd = jax.jit(functools.partial(attn_net_gated_forward, tile_n=2048))
    A, x_out = fwd(x, wa, ba, wb, bb, wc, bc)
    jax.block_until_ready((A, x_out))
    assert A.shape == (N, C)
    assert x_out.shape == (N, L)
    assert jnp.allclose(A, A_ref, atol=2e-2, rtol=2e-2)
    assert jnp.array_equal(x_out, x)

    # Full-precision path: tight tolerance against the f32 reference.
    fwd32 = jax.jit(functools.partial(attn_net_gated_forward, tile_n=2048,
                                      compute_dtype=jnp.float32))
    A32, x_out32 = fwd32(x, wa, ba, wb, bb, wc, bc)
    jax.block_until_ready((A32, x_out32))
    assert jnp.allclose(A32, A_ref, atol=1e-5, rtol=1e-5)
    assert jnp.array_equal(x_out32, x)

    print("KERNEL_OK")
</pallas_src>

<mosaic_0001>
module attributes {stable_mosaic.version = 11 : i64} {
  func.func @_gated_attn_kernel(%arg0: i32, %arg1: memref<256x32xbf16, #tpu.memory_space<vmem>>, %arg2: memref<32x32xbf16, #tpu.memory_space<vmem>>, %arg3: memref<1x32xf32, #tpu.memory_space<vmem>>, %arg4: memref<16x128xbf16, #tpu.memory_space<vmem>>, %arg5: memref<1x128xf32, #tpu.memory_space<vmem>>, %arg6: memref<256x1xf32, #tpu.memory_space<vmem>>) attributes {dimension_semantics = [#tpu.dimension_semantics<parallel>], iteration_bounds = array<i64: 1>, scalar_prefetch = 0 : i64, scratch_operands = 0 : i64, tpu.core_type = #tpu.core_type<tc>, window_params = [{transform_indices = @transform_0, window_bounds = array<i64: 256, 32>}, {pipeline_mode = #tpu.pipeline_mode<synchronous>, transform_indices = @transform_1, window_bounds = array<i64: 32, 32>}, {pipeline_mode = #tpu.pipeline_mode<synchronous>, transform_indices = @transform_2, window_bounds = array<i64: 1, 32>}, {pipeline_mode = #tpu.pipeline_mode<synchronous>, transform_indices = @transform_3, window_bounds = array<i64: 16, 128>}, {pipeline_mode = #tpu.pipeline_mode<synchronous>, transform_indices = @transform_4, window_bounds = array<i64: 1, 128>}, {transform_indices = @transform_5, window_bounds = array<i64: 256, 1>}]} {
    %c0 = arith.constant 0 : index
    %c0_0 = arith.constant 0 : index
    %0 = vector.load %arg1[%c0, %c0_0] : memref<256x32xbf16, #tpu.memory_space<vmem>>, vector<256x32xbf16>
    %c0_1 = arith.constant 0 : index
    %c0_2 = arith.constant 0 : index
    %1 = vector.load %arg2[%c0_1, %c0_2] : memref<32x32xbf16, #tpu.memory_space<vmem>>, vector<32x32xbf16>
    %cst = arith.constant dense<0.000000e+00> : vector<256x32xf32>
    %2 = tpu.matmul %0, %1, %cst {dimension_numbers = #tpu.dot_dimension_numbers<[1], [0], [0], [1], [0, 0, 1, 1], [], []>} : vector<256x32xbf16>, vector<32x32xbf16>, vector<256x32xf32> -> vector<256x32xf32>
    %c0_3 = arith.constant 0 : index
    %c0_4 = arith.constant 0 : index
    %3 = vector.load %arg3[%c0_3, %c0_4] : memref<1x32xf32, #tpu.memory_space<vmem>>, vector<1x32xf32>
    %4 = vector.broadcast %3 : vector<1x32xf32> to vector<256x32xf32>
    %5 = arith.addf %2, %4 : vector<256x32xf32>
    %6 = vector.extract_strided_slice %5 {offsets = [0, 0], sizes = [256, 16], strides = [1, 1]} : vector<256x32xf32> to vector<256x16xf32>
    %7 = math.tanh %6 : vector<256x16xf32>
    %8 = vector.extract_strided_slice %5 {offsets = [0, 16], sizes = [256, 16], strides = [1, 1]} : vector<256x32xf32> to vector<256x16xf32>
    %9 = arith.negf %8 : vector<256x16xf32>
    %10 = math.exp %9 : vector<256x16xf32>
    %cst_5 = arith.constant 1.000000e+00 : f32
    %11 = vector.broadcast %cst_5 : f32 to vector<256x16xf32>
    %12 = arith.addf %11, %10 : vector<256x16xf32>
    %13 = arith.divf %11, %12 : vector<256x16xf32>
    %14 = arith.mulf %7, %13 : vector<256x16xf32>
    %15 = arith.truncf %14 : vector<256x16xf32> to vector<256x16xbf16>
    %c0_6 = arith.constant 0 : index
    %c0_7 = arith.constant 0 : index
    %16 = vector.load %arg4[%c0_6, %c0_7] : memref<16x128xbf16, #tpu.memory_space<vmem>>, vector<16x128xbf16>
    %cst_8 = arith.constant dense<0.000000e+00> : vector<256x128xf32>
    %17 = tpu.matmul %15, %16, %cst_8 {dimension_numbers = #tpu.dot_dimension_numbers<[1], [0], [0], [1], [0, 0, 1, 1], [], []>} : vector<256x16xbf16>, vector<16x128xbf16>, vector<256x128xf32> -> vector<256x128xf32>
    %c0_9 = arith.constant 0 : index
    %c0_10 = arith.constant 0 : index
    %18 = vector.load %arg5[%c0_9, %c0_10] : memref<1x128xf32, #tpu.memory_space<vmem>>, vector<1x128xf32>
    %19 = vector.broadcast %18 : vector<1x128xf32> to vector<256x128xf32>
    %20 = arith.addf %17, %19 : vector<256x128xf32>
    %21 = vector.extract_strided_slice %20 {offsets = [0, 0], sizes = [256, 1], strides = [1, 1]} : vector<256x128xf32> to vector<256x1xf32>
    %c0_11 = arith.constant 0 : index
    %c0_12 = arith.constant 0 : index
    %22 = vector.load %arg6[%c0_11, %c0_12] : memref<256x1xf32, #tpu.memory_space<vmem>>, vector<256x1xf32>
    tpu.vector_store %arg6[%c0_11, %c0_12], %21 {strides = array<i32>} : memref<256x1xf32, #tpu.memory_space<vmem>>, vector<256x1xf32>,
    return
  }
  func.func @transform_0(%arg0: i32) -> (i32, i32) {
    %c0_i32 = arith.constant 0 : i32
    %c0_i32_0 = arith.constant 0 : i32
    return %arg0, %c0_i32 : i32, i32
  }
  func.func @transform_1(%arg0: i32) -> (i32, i32) {
    %c0_i32 = arith.constant 0 : i32
    %c0_i32_0 = arith.constant 0 : i32
    %c0_i32_1 = arith.constant 0 : i32
    return %c0_i32, %c0_i32_0 : i32, i32
  }
  func.func @transform_2(%arg0: i32) -> (i32, i32) {
    %c0_i32 = arith.constant 0 : i32
    %c0_i32_0 = arith.constant 0 : i32
    %c0_i32_1 = arith.constant 0 : i32
    return %c0_i32, %c0_i32_0 : i32, i32
  }
  func.func @transform_3(%arg0: i32) -> (i32, i32) {
    %c0_i32 = arith.constant 0 : i32
    %c0_i32_0 = arith.constant 0 : i32
    %c0_i32_1 = arith.constant 0 : i32
    return %c0_i32, %c0_i32_0 : i32, i32
  }
  func.func @transform_4(%arg0: i32) -> (i32, i32) {
    %c0_i32 = arith.constant 0 : i32
    %c0_i32_0 = arith.constant 0 : i32
    %c0_i32_1 = arith.constant 0 : i32
    return %c0_i32, %c0_i32_0 : i32, i32
  }
  func.func @transform_5(%arg0: i32) -> (i32, i32) {
    %c0_i32 = arith.constant 0 : i32
    %c0_i32_0 = arith.constant 0 : i32
    return %arg0, %c0_i32 : i32, i32
  }
}

</mosaic_0001>

<llo_original>
// kernel: attn_net_gated_forward.1
$region0: #{attn_net_gated_forward.1}
  #allocation0 [shape = 'u32[]', space=smem, size = 0x4, offset = 0x4, fixed_abs, tag = 'smem constant byte address 0x4 - core index']
  #allocation1 [shape = 'u32[144,128]{1,0:T(1,128)}', space=vmem, size = 0x12000, scoped, tag = 'internal scratch']
  %s0 = inlined_call_operand.vmem [shape: bf16[256,32], index: 0, kind: input, shape index: {}]
  %s1 = inlined_call_operand.vmem [shape: bf16[32,32], index: 1, kind: input, shape index: {}]
  %s2 = inlined_call_operand.vmem [shape: f32[1,32], index: 2, kind: input, shape index: {}]
  %s3 = inlined_call_operand.vmem [shape: bf16[16,128], index: 3, kind: input, shape index: {}]
  %s4 = inlined_call_operand.vmem [shape: f32[1,128], index: 4, kind: input, shape index: {}]
  %s5 = inlined_call_operand.vmem [shape: f32[256,1], index: 5, kind: output, shape index: {}]
  %s6 = sld [smem:[#allocation0]]
  $region30: #{attn_net_gated_forward.1} parent=0
    _
  %s8 = ssub.s32 1, %s6
  %s9 = scalar_select 0, %s8, %s6
  // Predicated region
  $region2: #{attn_net_gated_forward.1} parent=0 // pred_check
    _
  $region3: #{attn_net_gated_forward.1} parent=0 // pred_check_branch
    %11 = sbr.rel (0) target = $region5
  $region4: #{attn_net_gated_forward.1} parent=0 // pred_region
    _
  $region5: #{attn_net_gated_forward.1} parent=0 // pred_fallthru
    _
  // Predicated region
  $region6: #{attn_net_gated_forward.1} parent=0 // pred_check
    _
  $region7: #{attn_net_gated_forward.1} parent=0 // pred_check_branch
    %13 = sbr.rel (0) target = $region9
  $region8: #{attn_net_gated_forward.1} parent=0 // pred_region
    _
  $region9: #{attn_net_gated_forward.1} parent=0 // pred_fallthru
    _
  // Predicated region
  $region10: #{attn_net_gated_forward.1} parent=0 // pred_check
    _
  $region11: #{attn_net_gated_forward.1} parent=0 // pred_check_branch
    %15 = sbr.rel (0) target = $region13
  $region12: #{attn_net_gated_forward.1} parent=0 // pred_region
    _
  $region13: #{attn_net_gated_forward.1} parent=0 // pred_fallthru
    _
  // Predicated region
  $region14: #{attn_net_gated_forward.1} parent=0 // pred_check
    _
  $region15: #{attn_net_gated_forward.1} parent=0 // pred_check_branch
    %17 = sbr.rel (0) target = $region17
  $region16: #{attn_net_gated_forward.1} parent=0 // pred_region
    _
  $region17: #{attn_net_gated_forward.1} parent=0 // pred_fallthru
    _
  // Predicated region
  $region18: #{attn_net_gated_forward.1} parent=0 // pred_check
    _
  $region19: #{attn_net_gated_forward.1} parent=0 // pred_check_branch
    %19 = sbr.rel (0) target = $region21
  $region20: #{attn_net_gated_forward.1} parent=0 // pred_region
    _
  $region21: #{attn_net_gated_forward.1} parent=0 // pred_fallthru
    _
  %v21 = vld [vmem:[%s0] sm:$0xf]
  %v22 = vld [vmem:[%s0 + $0x4] sm:$0xf]
  %v23 = vld [vmem:[%s0 + $0x8] sm:$0xf]
  %v24 = vld [vmem:[%s0 + $0xc] sm:$0xf]
  %v25 = vld [vmem:[%s0 + $0x10] sm:$0xf]
  %v26 = vld [vmem:[%s0 + $0x14] sm:$0xf]
  %v27 = vld [vmem:[%s0 + $0x18] sm:$0xf]
  %v28 = vld [vmem:[%s0 + $0x1c] sm:$0xf]
  %v29 = vld [vmem:[%s0 + $0x20] sm:$0xf]
  %v30 = vld [vmem:[%s0 + $0x24] sm:$0xf]
  %v31 = vld [vmem:[%s0 + $0x28] sm:$0xf]
  %v32 = vld [vmem:[%s0 + $0x2c] sm:$0xf]
  %v33 = vld [vmem:[%s0 + $0x30] sm:$0xf]
  %v34 = vld [vmem:[%s0 + $0x34] sm:$0xf]
  %v35 = vld [vmem:[%s0 + $0x38] sm:$0xf]
  %v36 = vld [vmem:[%s0 + $0x3c] sm:$0xf]
  %v37 = vld [vmem:[%s0 + $0x40] sm:$0xf]
  %v38 = vld [vmem:[%s0 + $0x44] sm:$0xf]
  %v39 = vld [vmem:[%s0 + $0x48] sm:$0xf]
  %v40 = vld [vmem:[%s0 + $0x4c] sm:$0xf]
  %v41 = vld [vmem:[%s0 + $0x50] sm:$0xf]
  %v42 = vld [vmem:[%s0 + $0x54] sm:$0xf]
  %v43 = vld [vmem:[%s0 + $0x58] sm:$0xf]
  %v44 = vld [vmem:[%s0 + $0x5c] sm:$0xf]
  %v45 = vld [vmem:[%s0 + $0x60] sm:$0xf]
  %v46 = vld [vmem:[%s0 + $0x64] sm:$0xf]
  %v47 = vld [vmem:[%s0 + $0x68] sm:$0xf]
  %v48 = vld [vmem:[%s0 + $0x6c] sm:$0xf]
  %v49 = vld [vmem:[%s0 + $0x70] sm:$0xf]
  %v50 = vld [vmem:[%s0 + $0x74] sm:$0xf]
  %v51 = vld [vmem:[%s0 + $0x78] sm:$0xf]
  %v52 = vld [vmem:[%s0 + $0x7c] sm:$0xf]
  %v53 = vld [vmem:[%s1] sm:$0xf]
  %v54 = vld [vmem:[%s1 + $0x4] sm:$0xf]
  %v55 = vld [vmem:[%s1 + $0x8] sm:$0xf]
  %v56 = vld [vmem:[%s1 + $0xc] sm:$0xf]
  %v57 = vld [vmem:[%s2] sm:$0x1]
  %v59 = vlaneseq
  %v60 = vshrl.u32 %v59, 7
  %v61 = vsub.s32 0, %v60
  %v62 = vrot.slane %v57, %v61
  %v96 = vunpack.c.l.b16 %v21
  %v97 = vunpack.c.l.b16 %v22
  %v98 = vunpack.c.l.b16 %v23
  %v99 = vunpack.c.l.b16 %v24
  %v100 = vunpack.c.l.b16 %v25
  %v101 = vunpack.c.l.b16 %v26
  %v102 = vunpack.c.l.b16 %v27
  %v103 = vunpack.c.l.b16 %v28
  %v104 = vunpack.c.l.b16 %v29
  %v105 = vunpack.c.l.b16 %v30
  %v106 = vunpack.c.l.b16 %v31
  %v107 = vunpack.c.l.b16 %v32
  %v108 = vunpack.c.l.b16 %v33
  %v109 = vunpack.c.l.b16 %v34
  %v110 = vunpack.c.l.b16 %v35
  %v111 = vunpack.c.l.b16 %v36
  %v112 = vunpack.c.l.b16 %v37
  %v113 = vunpack.c.l.b16 %v38
  %v114 = vunpack.c.l.b16 %v39
  %v115 = vunpack.c.l.b16 %v40
  %v116 = vunpack.c.l.b16 %v41
  %v117 = vunpack.c.l.b16 %v42
  %v118 = vunpack.c.l.b16 %v43
  %v119 = vunpack.c.l.b16 %v44
  %v120 = vunpack.c.l.b16 %v45
  %v121 = vunpack.c.l.b16 %v46
  %v122 = vunpack.c.l.b16 %v47
  %v123 = vunpack.c.l.b16 %v48
  %v124 = vunpack.c.l.b16 %v49
  %v125 = vunpack.c.l.b16 %v50
  %v126 = vunpack.c.l.b16 %v51
  %v127 = vunpack.c.l.b16 %v52
  %v128 = vpack.c.b16 %v97, %v96
  %v129 = vpack.c.b16 %v99, %v98
  %v130 = vpack.c.b16 %v101, %v100
  %v131 = vpack.c.b16 %v103, %v102
  %v132 = vpack.c.b16 %v105, %v104
  %v133 = vpack.c.b16 %v107, %v106
  %v134 = vpack.c.b16 %v109, %v108
  %v135 = vpack.c.b16 %v111, %v110
  %v136 = vpack.c.b16 %v113, %v112
  %v137 = vpack.c.b16 %v115, %v114
  %v138 = vpack.c.b16 %v117, %v116
  %v139 = vpack.c.b16 %v119, %v118
  %v140 = vpack.c.b16 %v121, %v120
  %v141 = vpack.c.b16 %v123, %v122
  %v142 = vpack.c.b16 %v125, %v124
  %v143 = vpack.c.b16 %v127, %v126
  %v148 = vunpack.c.l.b16 %v53
  %v149 = vunpack.c.l.b16 %v54
  %v150 = vunpack.c.l.b16 %v55
  %v151 = vunpack.c.l.b16 %v56
  %v152 = vpack.c.b16 %v149, %v148
  %v153 = vpack.c.b16 %v151, %v150
  %vm156 = vcmask 261120
  %v158 = vsel %vm156, %v128, 0
  %v161 = vsel %vm156, %v129, 0
  %v164 = vsel %vm156, %v130, 0
  %v167 = vsel %vm156, %v131, 0
  %v170 = vsel %vm156, %v132, 0
  %v173 = vsel %vm156, %v133, 0
  %v176 = vsel %vm156, %v134, 0
  %v179 = vsel %vm156, %v135, 0
  %v182 = vsel %vm156, %v136, 0
  %v185 = vsel %vm156, %v137, 0
  %v188 = vsel %vm156, %v138, 0
  %v191 = vsel %vm156, %v139, 0
  %v194 = vsel %vm156, %v140, 0
  %v197 = vsel %vm156, %v141, 0
  %v200 = vsel %vm156, %v142, 0
  %v203 = vsel %vm156, %v143, 0
  %205 = vmatprep.subr.bf16.mxu0 0
  %206 = vmatpush1.bf16.msra.mxu0 %v152
  %207 = vmatprep.subr.bf16.mxu0 0
  %208 = vmatpush1.bf16.msra.mxu0 %v153
  %209 = vmatprep.subr.bf16.mxu0 0
  %210 = vmatpush1.bf16.msra.mxu0 0
  %211 = vmatprep.subr.bf16.mxu0 0
  %212 = vmatpush1.bf16.msra.mxu0 0
  %213 = vmatprep.subr.bf16.mxu0 0
  %214 = vmatpush1.bf16.msra.mxu0 0
  %215 = vmatprep.subr.bf16.mxu0 0
  %216 = vmatpush1.bf16.msra.mxu0 0
  %217 = vmatprep.subr.bf16.mxu0 0
  %218 = vmatpush1.bf16.msra.mxu0 0
  %219 = vmatprep.subr.bf16.mxu0 0
  %220 = vmatpush1.bf16.msra.mxu0 0
  %221 = vmatprep.subr.bf16.mxu0 0
  %222 = vmatpush1.bf16.msra.mxu0 0
  %223 = vmatprep.subr.bf16.mxu0 0
  %224 = vmatpush1.bf16.msra.mxu0 0
  %225 = vmatprep.subr.bf16.mxu0 0
  %226 = vmatpush1.bf16.msra.mxu0 0
  %227 = vmatprep.subr.bf16.mxu0 0
  %228 = vmatpush1.bf16.msra.mxu0 0
  %229 = vmatprep.subr.bf16.mxu0 0
  %230 = vmatpush1.bf16.msra.mxu0 0
  %231 = vmatprep.subr.bf16.mxu0 0
  %232 = vmatpush1.bf16.msra.mxu0 0
  %233 = vmatprep.subr.bf16.mxu0 0
  %234 = vmatpush1.bf16.msra.mxu0 0
  %235 = vmatprep.subr.bf16.mxu0 0
  %236 = vmatpush1.bf16.msra.mxu0 0
  %237 = vmatprep.mubr.bf16.mxu0 0
  %238 = vmatmul.mubr.bf16.gmra.mrb[0].mxu0 %v158
  %v239 = vpop.f32.mrb[0].mxu0
  %v240 = vadd.f32 %v62, %v239
  %v241 = vpop.f32.mrb[0].mxu0
  %v242 = vpop.f32.mrb[0].mxu0
  %v243 = vadd.f32 %v62, %v242
  %v244 = vpop.f32.mrb[0].mxu0
  %245 = vmatprep.mubr.bf16.mxu0 0
  %246 = vmatmul.mubr.bf16.gmra.mrb[0].mxu0 %v161
  %v247 = vpop.f32.mrb[0].mxu0
  %v248 = vadd.f32 %v62, %v247
  %v249 = vpop.f32.mrb[0].mxu0
  %v250 = vpop.f32.mrb[0].mxu0
  %v251 = vadd.f32 %v62, %v250
  %v252 = vpop.f32.mrb[0].mxu0
  %253 = vmatprep.mubr.bf16.mxu0 0
  %254 = vmatmul.mubr.bf16.gmra.mrb[0].mxu0 %v164
  %v255 = vpop.f32.mrb[0].mxu0
  %v256 = vadd.f32 %v62, %v255
  %v257 = vpop.f32.mrb[0].mxu0
  %v258 = vpop.f32.mrb[0].mxu0
  %v259 = vadd.f32 %v62, %v258
  %v260 = vpop.f32.mrb[0].mxu0
  %261 = vmatprep.mubr.bf16.mxu0 0
  %262 = vmatmul.mubr.bf16.gmra.mrb[0].mxu0 %v167
  %v263 = vpop.f32.mrb[0].mxu0
  %v264 = vadd.f32 %v62, %v263
  %v265 = vpop.f32.mrb[0].mxu0
  %v266 = vpop.f32.mrb[0].mxu0
  %v267 = vadd.f32 %v62, %v266
  %v268 = vpop.f32.mrb[0].mxu0
  %269 = vmatprep.mubr.bf16.mxu0 0
  %270 = vmatmul.mubr.bf16.gmra.mrb[0].mxu0 %v170
  %v271 = vpop.f32.mrb[0].mxu0
  %v272 = vadd.f32 %v62, %v271
  %v273 = vpop.f32.mrb[0].mxu0
  %v274 = vpop.f32.mrb[0].mxu0
  %v275 = vadd.f32 %v62, %v274
  %v276 = vpop.f32.mrb[0].mxu0
  %277 = vmatprep.mubr.bf16.mxu0 0
  %278 = vmatmul.mubr.bf16.gmra.mrb[0].mxu0 %v173
  %v279 = vpop.f32.mrb[0].mxu0
  %v280 = vadd.f32 %v62, %v279
  %v281 = vpop.f32.mrb[0].mxu0
  %v282 = vpop.f32.mrb[0].mxu0
  %v283 = vadd.f32 %v62, %v282
  %v284 = vpop.f32.mrb[0].mxu0
  %285 = vmatprep.mubr.bf16.mxu0 0
  %286 = vmatmul.mubr.bf16.gmra.mrb[0].mxu0 %v176
  %v287 = vpop.f32.mrb[0].mxu0
  %v288 = vadd.f32 %v62, %v287
  %v289 = vpop.f32.mrb[0].mxu0
  %v290 = vpop.f32.mrb[0].mxu0
  %v291 = vadd.f32 %v62, %v290
  %v292 = vpop.f32.mrb[0].mxu0
  %293 = vmatprep.mubr.bf16.mxu0 0
  %294 = vmatmul.mubr.bf16.gmra.mrb[0].mxu0 %v179
  %v295 = vpop.f32.mrb[0].mxu0
  %v296 = vadd.f32 %v62, %v295
  %v297 = vpop.f32.mrb[0].mxu0
  %v298 = vpop.f32.mrb[0].mxu0
  %v299 = vadd.f32 %v62, %v298
  %v300 = vpop.f32.mrb[0].mxu0
  %301 = vmatprep.mubr.bf16.mxu0 0
  %302 = vmatmul.mubr.bf16.gmra.mrb[0].mxu0 %v182
  %v303 = vpop.f32.mrb[0].mxu0
  %v304 = vadd.f32 %v62, %v303
  %v305 = vpop.f32.mrb[0].mxu0
  %v306 = vpop.f32.mrb[0].mxu0
  %v307 = vadd.f32 %v62, %v306
  %v308 = vpop.f32.mrb[0].mxu0
  %309 = vmatprep.mubr.bf16.mxu0 0
  %310 = vmatmul.mubr.bf16.gmra.mrb[0].mxu0 %v185
  %v311 = vpop.f32.mrb[0].mxu0
  %v312 = vadd.f32 %v62, %v311
  %v313 = vpop.f32.mrb[0].mxu0
  %v314 = vpop.f32.mrb[0].mxu0
  %v315 = vadd.f32 %v62, %v314
  %v316 = vpop.f32.mrb[0].mxu0
  %317 = vmatprep.mubr.bf16.mxu0 0
  %318 = vmatmul.mubr.bf16.gmra.mrb[0].mxu0 %v188
  %v319 = vpop.f32.mrb[0].mxu0
  %v320 = vadd.f32 %v62, %v319
  %v321 = vpop.f32.mrb[0].mxu0
  %v322 = vpop.f32.mrb[0].mxu0
  %v323 = vadd.f32 %v62, %v322
  %v324 = vpop.f32.mrb[0].mxu0
  %325 = vmatprep.mubr.bf16.mxu0 0
  %326 = vmatmul.mubr.bf16.gmra.mrb[0].mxu0 %v191
  %v327 = vpop.f32.mrb[0].mxu0
  %v328 = vadd.f32 %v62, %v327
  %v329 = vpop.f32.mrb[0].mxu0
  %v330 = vpop.f32.mrb[0].mxu0
  %v331 = vadd.f32 %v62, %v330
  %v332 = vpop.f32.mrb[0].mxu0
  %333 = vmatprep.mubr.bf16.mxu0 0
  %334 = vmatmul.mubr.bf16.gmra.mrb[0].mxu0 %v194
  %v335 = vpop.f32.mrb[0].mxu0
  %v336 = vadd.f32 %v62, %v335
  %v337 = vpop.f32.mrb[0].mxu0
  %v338 = vpop.f32.mrb[0].mxu0
  %v339 = vadd.f32 %v62, %v338
  %v340 = vpop.f32.mrb[0].mxu0
  %341 = vmatprep.mubr.bf16.mxu0 0
  %342 = vmatmul.mubr.bf16.gmra.mrb[0].mxu0 %v197
  %v343 = vpop.f32.mrb[0].mxu0
  %v344 = vadd.f32 %v62, %v343
  %v345 = vpop.f32.mrb[0].mxu0
  %v346 = vpop.f32.mrb[0].mxu0
  %v347 = vadd.f32 %v62, %v346
  %v348 = vpop.f32.mrb[0].mxu0
  %349 = vmatprep.mubr.bf16.mxu0 0
  %350 = vmatmul.mubr.bf16.gmra.mrb[0].mxu0 %v200
  %v351 = vpop.f32.mrb[0].mxu0
  %v352 = vadd.f32 %v62, %v351
  %v353 = vpop.f32.mrb[0].mxu0
  %v354 = vpop.f32.mrb[0].mxu0
  %v355 = vadd.f32 %v62, %v354
  %v356 = vpop.f32.mrb[0].mxu0
  %357 = vmatprep.mubr.bf16.mxu0 0
  %358 = vmatmul.mubr.bf16.gmra.mrb[0].mxu0 %v203
  %v359 = vpop.f32.mrb[0].mxu0
  %v360 = vadd.f32 %v62, %v359
  %v361 = vpop.f32.mrb[0].mxu0
  %v362 = vpop.f32.mrb[0].mxu0
  %v363 = vadd.f32 %v62, %v362
  %v364 = vpop.f32.mrb[0].mxu0
  %365 = vdwg.mxu0
  %v366 = vtanh.pop %v240
  %v367 = vtanh.pop %v243
  %v368 = vtanh.pop %v248
  %v369 = vtanh.pop %v251
  %v370 = vtanh.pop %v256
  %v371 = vtanh.pop %v259
  %v372 = vtanh.pop %v264
  %v373 = vtanh.pop %v267
  %v374 = vtanh.pop %v272
  %v375 = vtanh.pop %v275
  %v376 = vtanh.pop %v280
  %v377 = vtanh.pop %v283
  %v378 = vtanh.pop %v288
  %v379 = vtanh.pop %v291
  %v380 = vtanh.pop %v296
  %v381 = vtanh.pop %v299
  %v382 = vtanh.pop %v304
  %v383 = vtanh.pop %v307
  %v384 = vtanh.pop %v312
  %v385 = vtanh.pop %v315
  %v386 = vtanh.pop %v320
  %v387 = vtanh.pop %v323
  %v388 = vtanh.pop %v328
  %v389 = vtanh.pop %v331
  %v390 = vtanh.pop %v336
  %v391 = vtanh.pop %v339
  %v392 = vtanh.pop %v344
  %v393 = vtanh.pop %v347
  %v394 = vtanh.pop %v352
  %v395 = vtanh.pop %v355
  %v396 = vtanh.pop %v360
  %v397 = vtanh.pop %v363
  %v398 = vxor.u32 %v240, 2147483648
  %v399 = vxor.u32 %v243, 2147483648
  %v400 = vxor.u32 %v248, 2147483648
  %v401 = vxor.u32 %v251, 2147483648
  %v402 = vxor.u32 %v256, 2147483648
  %v403 = vxor.u32 %v259, 2147483648
  %v404 = vxor.u32 %v264, 2147483648
  %v405 = vxor.u32 %v267, 2147483648
  %v406 = vxor.u32 %v272, 2147483648
  %v407 = vxor.u32 %v275, 2147483648
  %v408 = vxor.u32 %v280, 2147483648
  %v409 = vxor.u32 %v283, 2147483648
  %v410 = vxor.u32 %v288, 2147483648
  %v411 = vxor.u32 %v291, 2147483648
  %v412 = vxor.u32 %v296, 2147483648
  %v413 = vxor.u32 %v299, 2147483648
  %v414 = vxor.u32 %v304, 2147483648
  %v415 = vxor.u32 %v307, 2147483648
  %v416 = vxor.u32 %v312, 2147483648
  %v417 = vxor.u32 %v315, 2147483648
  %v418 = vxor.u32 %v320, 2147483648
  %v419 = vxor.u32 %v323, 2147483648
  %v420 = vxor.u32 %v328, 2147483648
  %v421 = vxor.u32 %v331, 2147483648
  %v422 = vxor.u32 %v336, 2147483648
  %v423 = vxor.u32 %v339, 2147483648
  %v424 = vxor.u32 %v344, 2147483648
  %v425 = vxor.u32 %v347, 2147483648
  %v426 = vxor.u32 %v352, 2147483648
  %v427 = vxor.u32 %v355, 2147483648
  %v428 = vxor.u32 %v360, 2147483648
  %v429 = vxor.u32 %v363, 2147483648
  %v430 = vmul.f32 %v398, 1.442695
  %v431 = vpow.pop %v430
  %v432 = vmul.f32 %v399, 1.442695
  %v433 = vpow.pop %v432
  %v434 = vmul.f32 %v400, 1.442695
  %v435 = vpow.pop %v434
  %v436 = vmul.f32 %v401, 1.442695
  %v437 = vpow.pop %v436
  %v438 = vmul.f32 %v402, 1.442695
  %v439 = vpow.pop %v438
  %v440 = vmul.f32 %v403, 1.442695
  %v441 = vpow.pop %v440
  %v442 = vmul.f32 %v404, 1.442695
  %v443 = vpow.pop %v442
  %v444 = vmul.f32 %v405, 1.442695
  %v445 = vpow.pop %v444
  %v446 = vmul.f32 %v406, 1.442695
  %v447 = vpow.pop %v446
  %v448 = vmul.f32 %v407, 1.442695
  %v449 = vpow.pop %v448
  %v450 = vmul.f32 %v408, 1.442695
  %v451 = vpow.pop %v450
  %v452 = vmul.f32 %v409, 1.442695
  %v453 = vpow.pop %v452
  %v454 = vmul.f32 %v410, 1.442695
  %v455 = vpow.pop %v454
  %v456 = vmul.f32 %v411, 1.442695
  %v457 = vpow.pop %v456
  %v458 = vmul.f32 %v412, 1.442695
  %v459 = vpow.pop %v458
  %v460 = vmul.f32 %v413, 1.442695
  %v461 = vpow.pop %v460
  %v462 = vmul.f32 %v414, 1.442695
  %v463 = vpow.pop %v462
  %v464 = vmul.f32 %v415, 1.442695
  %v465 = vpow.pop %v464
  %v466 = vmul.f32 %v416, 1.442695
  %v467 = vpow.pop %v466
  %v468 = vmul.f32 %v417, 1.442695
  %v469 = vpow.pop %v468
  %v470 = vmul.f32 %v418, 1.442695
  %v471 = vpow.pop %v470
  %v472 = vmul.f32 %v419, 1.442695
  %v473 = vpow.pop %v472
  %v474 = vmul.f32 %v420, 1.442695
  %v475 = vpow.pop %v474
  %v476 = vmul.f32 %v421, 1.442695
  %v477 = vpow.pop %v476
  %v478 = vmul.f32 %v422, 1.442695
  %v479 = vpow.pop %v478
  %v480 = vmul.f32 %v423, 1.442695
  %v481 = vpow.pop %v480
  %v482 = vmul.f32 %v424, 1.442695
  %v483 = vpow.pop %v482
  %v484 = vmul.f32 %v425, 1.442695
  %v485 = vpow.pop %v484
  %v486 = vmul.f32 %v426, 1.442695
  %v487 = vpow.pop %v486
  %v488 = vmul.f32 %v427, 1.442695
  %v489 = vpow.pop %v488
  %v490 = vmul.f32 %v428, 1.442695
  %v491 = vpow.pop %v490
  %v492 = vmul.f32 %v429, 1.442695
  %v493 = vpow.pop %v492
  %v494 = vadd.f32 %v431, 1.0
  %v495 = vadd.f32 %v433, 1.0
  %v496 = vadd.f32 %v435, 1.0
  %v497 = vadd.f32 %v437, 1.0
  %v498 = vadd.f32 %v439, 1.0
  %v499 = vadd.f32 %v441, 1.0
  %v500 = vadd.f32 %v443, 1.0
  %v501 = vadd.f32 %v445, 1.0
  %v502 = vadd.f32 %v447, 1.0
  %v503 = vadd.f32 %v449, 1.0
  %v504 = vadd.f32 %v451, 1.0
  %v505 = vadd.f32 %v453, 1.0
  %v506 = vadd.f32 %v455, 1.0
  %v507 = vadd.f32 %v457, 1.0
  %v508 = vadd.f32 %v459, 1.0
  %v509 = vadd.f32 %v461, 1.0
  %v510 = vadd.f32 %v463, 1.0
  %v511 = vadd.f32 %v465, 1.0
  %v512 = vadd.f32 %v467, 1.0
  %v513 = vadd.f32 %v469, 1.0
  %v514 = vadd.f32 %v471, 1.0
  %v515 = vadd.f32 %v473, 1.0
  %v516 = vadd.f32 %v475, 1.0
  %v517 = vadd.f32 %v477, 1.0
  %v518 = vadd.f32 %v479, 1.0
  %v519 = vadd.f32 %v481, 1.0
  %v520 = vadd.f32 %v483, 1.0
  %v521 = vadd.f32 %v485, 1.0
  %v522 = vadd.f32 %v487, 1.0
  %v523 = vadd.f32 %v489, 1.0
  %v524 = vadd.f32 %v491, 1.0
  %v525 = vadd.f32 %v493, 1.0
  %v526 = vrcp.pop %v494
  %v527 = vmul.f32 1.0, %v526
  %v528 = vrcp.pop %v495
  %v529 = vmul.f32 1.0, %v528
  %v530 = vrcp.pop %v496
  %v531 = vmul.f32 1.0, %v530
  %v532 = vrcp.pop %v497
  %v533 = vmul.f32 1.0, %v532
  %v534 = vrcp.pop %v498
  %v535 = vmul.f32 1.0, %v534
  %v536 = vrcp.pop %v499
  %v537 = vmul.f32 1.0, %v536
  %v538 = vrcp.pop %v500
  %v539 = vmul.f32 1.0, %v538
  %v540 = vrcp.pop %v501
  %v541 = vmul.f32 1.0, %v540
  %v542 = vrcp.pop %v502
  %v543 = vmul.f32 1.0, %v542
  %v544 = vrcp.pop %v503
  %v545 = vmul.f32 1.0, %v544
  %v546 = vrcp.pop %v504
  %v547 = vmul.f32 1.0, %v546
  %v548 = vrcp.pop %v505
  %v549 = vmul.f32 1.0, %v548
  %v550 = vrcp.pop %v506
  %v551 = vmul.f32 1.0, %v550
  %v552 = vrcp.pop %v507
  %v553 = vmul.f32 1.0, %v552
  %v554 = vrcp.pop %v508
  %v555 = vmul.f32 1.0, %v554
  %v556 = vrcp.pop %v509
  %v557 = vmul.f32 1.0, %v556
  %v558 = vrcp.pop %v510
  %v559 = vmul.f32 1.0, %v558
  %v560 = vrcp.pop %v511
  %v561 = vmul.f32 1.0, %v560
  %v562 = vrcp.pop %v512
  %v563 = vmul.f32 1.0, %v562
  %v564 = vrcp.pop %v513
  %v565 = vmul.f32 1.0, %v564
  %v566 = vrcp.pop %v514
  %v567 = vmul.f32 1.0, %v566
  %v568 = vrcp.pop %v515
  %v569 = vmul.f32 1.0, %v568
  %v570 = vrcp.pop %v516
  %v571 = vmul.f32 1.0, %v570
  %v572 = vrcp.pop %v517
  %v573 = vmul.f32 1.0, %v572
  %v574 = vrcp.pop %v518
  %v575 = vmul.f32 1.0, %v574
  %v576 = vrcp.pop %v519
  %v577 = vmul.f32 1.0, %v576
  %v578 = vrcp.pop %v520
  %v579 = vmul.f32 1.0, %v578
  %v580 = vrcp.pop %v521
  %v581 = vmul.f32 1.0, %v580
  %v582 = vrcp.pop %v522
  %v583 = vmul.f32 1.0, %v582
  %v584 = vrcp.pop %v523
  %v585 = vmul.f32 1.0, %v584
  %v586 = vrcp.pop %v524
  %v587 = vmul.f32 1.0, %v586
  %v588 = vrcp.pop %v525
  %v589 = vmul.f32 1.0, %v588
  %622 = vrot.lane.b32.xlu0 %v527, 112
  %v623 = vpop.permute.xlu0 %622
  %624 = vrot.lane.b32.xlu0 %v529, 112
  %v625 = vpop.permute.xlu0 %624
  %626 = vrot.lane.b32.xlu0 %v531, 112
  %v627 = vpop.permute.xlu0 %626
  %628 = vrot.lane.b32.xlu0 %v533, 112
  %v629 = vpop.permute.xlu0 %628
  %630 = vrot.lane.b32.xlu0 %v535, 112
  %v631 = vpop.permute.xlu0 %630
  %632 = vrot.lane.b32.xlu0 %v537, 112
  %v633 = vpop.permute.xlu0 %632
  %634 = vrot.lane.b32.xlu0 %v539, 112
  %v635 = vpop.permute.xlu0 %634
  %636 = vrot.lane.b32.xlu0 %v541, 112
  %v637 = vpop.permute.xlu0 %636
  %638 = vrot.lane.b32.xlu0 %v543, 112
  %v639 = vpop.permute.xlu0 %638
  %640 = vrot.lane.b32.xlu0 %v545, 112
  %v641 = vpop.permute.xlu0 %640
  %642 = vrot.lane.b32.xlu0 %v547, 112
  %v643 = vpop.permute.xlu0 %642
  %644 = vrot.lane.b32.xlu0 %v549, 112
  %v645 = vpop.permute.xlu0 %644
  %646 = vrot.lane.b32.xlu0 %v551, 112
  %v647 = vpop.permute.xlu0 %646
  %648 = vrot.lane.b32.xlu0 %v553, 112
  %v649 = vpop.permute.xlu0 %648
  %650 = vrot.lane.b32.xlu0 %v555, 112
  %v651 = vpop.permute.xlu0 %650
  %652 = vrot.lane.b32.xlu0 %v557, 112
  %v653 = vpop.permute.xlu0 %652
  %654 = vrot.lane.b32.xlu0 %v559, 112
  %v655 = vpop.permute.xlu0 %654
  %656 = vrot.lane.b32.xlu0 %v561, 112
  %v657 = vpop.permute.xlu0 %656
  %658 = vrot.lane.b32.xlu0 %v563, 112
  %v659 = vpop.permute.xlu0 %658
  %660 = vrot.lane.b32.xlu0 %v565, 112
  %v661 = vpop.permute.xlu0 %660
  %662 = vrot.lane.b32.xlu0 %v567, 112
  %v663 = vpop.permute.xlu0 %662
  %664 = vrot.lane.b32.xlu0 %v569, 112
  %v665 = vpop.permute.xlu0 %664
  %666 = vrot.lane.b32.xlu0 %v571, 112
  %v667 = vpop.permute.xlu0 %666
  %668 = vrot.lane.b32.xlu0 %v573, 112
  %v669 = vpop.permute.xlu0 %668
  %670 = vrot.lane.b32.xlu0 %v575, 112
  %v671 = vpop.permute.xlu0 %670
  %672 = vrot.lane.b32.xlu0 %v577, 112
  %v673 = vpop.permute.xlu0 %672
  %674 = vrot.lane.b32.xlu0 %v579, 112
  %v675 = vpop.permute.xlu0 %674
  %676 = vrot.lane.b32.xlu0 %v581, 112
  %v677 = vpop.permute.xlu0 %676
  %678 = vrot.lane.b32.xlu0 %v583, 112
  %v679 = vpop.permute.xlu0 %678
  %680 = vrot.lane.b32.xlu0 %v585, 112
  %v681 = vpop.permute.xlu0 %680
  %682 = vrot.lane.b32.xlu0 %v587, 112
  %v683 = vpop.permute.xlu0 %682
  %684 = vrot.lane.b32.xlu0 %v589, 112
  %v685 = vpop.permute.xlu0 %684
  %v718 = vmul.f32 %v366, %v623
  %v719 = vmul.f32 %v367, %v625
  %v720 = vmul.f32 %v368, %v627
  %v721 = vmul.f32 %v369, %v629
  %v722 = vmul.f32 %v370, %v631
  %v723 = vmul.f32 %v371, %v633
  %v724 = vmul.f32 %v372, %v635
  %v725 = vmul.f32 %v373, %v637
  %v726 = vmul.f32 %v374, %v639
  %v727 = vmul.f32 %v375, %v641
  %v728 = vmul.f32 %v376, %v643
  %v729 = vmul.f32 %v377, %v645
  %v730 = vmul.f32 %v378, %v647
  %v731 = vmul.f32 %v379, %v649
  %v732 = vmul.f32 %v380, %v651
  %v733 = vmul.f32 %v381, %v653
  %v734 = vmul.f32 %v382, %v655
  %v735 = vmul.f32 %v383, %v657
  %v736 = vmul.f32 %v384, %v659
  %v737 = vmul.f32 %v385, %v661
  %v738 = vmul.f32 %v386, %v663
  %v739 = vmul.f32 %v387, %v665
  %v740 = vmul.f32 %v388, %v667
  %v741 = vmul.f32 %v389, %v669
  %v742 = vmul.f32 %v390, %v671
  %v743 = vmul.f32 %v391, %v673
  %v744 = vmul.f32 %v392, %v675
  %v745 = vmul.f32 %v393, %v677
  %v746 = vmul.f32 %v394, %v679
  %v747 = vmul.f32 %v395, %v681
  %v748 = vmul.f32 %v396, %v683
  %v749 = vmul.f32 %v397, %v685
  %v750 = vpack.c.bf16 %v719, %v718
  %v751 = vpack.c.bf16 %v721, %v720
  %v752 = vpack.c.bf16 %v723, %v722
  %v753 = vpack.c.bf16 %v725, %v724
  %v754 = vpack.c.bf16 %v727, %v726
  %v755 = vpack.c.bf16 %v729, %v728
  %v756 = vpack.c.bf16 %v731, %v730
  %v757 = vpack.c.bf16 %v733, %v732
  %v758 = vpack.c.bf16 %v735, %v734
  %v759 = vpack.c.bf16 %v737, %v736
  %v760 = vpack.c.bf16 %v739, %v738
  %v761 = vpack.c.bf16 %v741, %v740
  %v762 = vpack.c.bf16 %v743, %v742
  %v763 = vpack.c.bf16 %v745, %v744
  %v764 = vpack.c.bf16 %v747, %v746
  %v765 = vpack.c.bf16 %v749, %v748
  %v766 = vld [vmem:[%s3] sm:$0xf]
  %v767 = vld [vmem:[%s3 + $0x4] sm:$0xf]
  %v768 = vld [vmem:[%s4] sm:$0x1]
  %v770 = vlaneseq
  %v771 = vshrl.u32 %v770, 7
  %v772 = vsub.s32 0, %v771
  %v773 = vrot.slane %v768, %v772
  %v777 = vunpack.c.l.b16 %v766
  %v778 = vunpack.c.l.b16 %v767
  %v779 = vpack.c.b16 %v778, %v777
  %vm781 = vcmask 130048
  %v783 = vsel %vm781, %v750, 0
  %v786 = vsel %vm781, %v751, 0
  %v789 = vsel %vm781, %v752, 0
  %v792 = vsel %vm781, %v753, 0
  %v795 = vsel %vm781, %v754, 0
  %v798 = vsel %vm781, %v755, 0
  %v801 = vsel %vm781, %v756, 0
  %v804 = vsel %vm781, %v757, 0
  %v807 = vsel %vm781, %v758, 0
  %v810 = vsel %vm781, %v759, 0
  %v813 = vsel %vm781, %v760, 0
  %v816 = vsel %vm781, %v761, 0
  %v819 = vsel %vm781, %v762, 0
  %v822 = vsel %vm781, %v763, 0
  %v825 = vsel %vm781, %v764, 0
  %v828 = vsel %vm781, %v765, 0
  %830 = vmatprep.subr.bf16.mxu0 0
  %831 = vmatpush1.bf16.msra.mxu0 %v779
  %832 = vmatprep.subr.bf16.mxu0 0
  %833 = vmatpush1.bf16.msra.mxu0 0
  %834 = vmatprep.subr.bf16.mxu0 0
  %835 = vmatpush1.bf16.msra.mxu0 0
  %836 = vmatprep.subr.bf16.mxu0 0
  %837 = vmatpush1.bf16.msra.mxu0 0
  %838 = vmatprep.subr.bf16.mxu0 0
  %839 = vmatpush1.bf16.msra.mxu0 0
  %840 = vmatprep.subr.bf16.mxu0 0
  %841 = vmatpush1.bf16.msra.mxu0 0
  %842 = vmatprep.subr.bf16.mxu0 0
  %843 = vmatpush1.bf16.msra.mxu0 0
  %844 = vmatprep.subr.bf16.mxu0 0
  %845 = vmatpush1.bf16.msra.mxu0 0
  %846 = vmatprep.subr.bf16.mxu0 0
  %847 = vmatpush1.bf16.msra.mxu0 0
  %848 = vmatprep.subr.bf16.mxu0 0
  %849 = vmatpush1.bf16.msra.mxu0 0
  %850 = vmatprep.subr.bf16.mxu0 0
  %851 = vmatpush1.bf16.msra.mxu0 0
  %852 = vmatprep.subr.bf16.mxu0 0
  %853 = vmatpush1.bf16.msra.mxu0 0
  %854 = vmatprep.subr.bf16.mxu0 0
  %855 = vmatpush1.bf16.msra.mxu0 0
  %856 = vmatprep.subr.bf16.mxu0 0
  %857 = vmatpush1.bf16.msra.mxu0 0
  %858 = vmatprep.subr.bf16.mxu0 0
  %859 = vmatpush1.bf16.msra.mxu0 0
  %860 = vmatprep.subr.bf16.mxu0 0
  %861 = vmatpush1.bf16.msra.mxu0 0
  %862 = vmatprep.mubr.bf16.mxu0 0
  %863 = vmatmul.mubr.bf16.gmra.mrb[0].mxu0 %v783
  %v864 = vpop.f32.mrb[0].mxu0
  %v865 = vadd.f32 %v773, %v864
  %v866 = vpop.f32.mrb[0].mxu0
  %v867 = vpop.f32.mrb[0].mxu0
  %v868 = vadd.f32 %v773, %v867
  %v869 = vpop.f32.mrb[0].mxu0
  %870 = vmatprep.mubr.bf16.mxu0 0
  %871 = vmatmul.mubr.bf16.gmra.mrb[0].mxu0 %v786
  %v872 = vpop.f32.mrb[0].mxu0
  %v873 = vadd.f32 %v773, %v872
  %v874 = vpop.f32.mrb[0].mxu0
  %v875 = vpop.f32.mrb[0].mxu0
  %v876 = vadd.f32 %v773, %v875
  %v877 = vpop.f32.mrb[0].mxu0
  %878 = vmatprep.mubr.bf16.mxu0 0
  %879 = vmatmul.mubr.bf16.gmra.mrb[0].mxu0 %v789
  %v880 = vpop.f32.mrb[0].mxu0
  %v881 = vadd.f32 %v773, %v880
  %v882 = vpop.f32.mrb[0].mxu0
  %v883 = vpop.f32.mrb[0].mxu0
  %v884 = vadd.f32 %v773, %v883
  %v885 = vpop.f32.mrb[0].mxu0
  %886 = vmatprep.mubr.bf16.mxu0 0
  %887 = vmatmul.mubr.bf16.gmra.mrb[0].mxu0 %v792
  %v888 = vpop.f32.mrb[0].mxu0
  %v889 = vadd.f32 %v773, %v888
  %v890 = vpop.f32.mrb[0].mxu0
  %v891 = vpop.f32.mrb[0].mxu0
  %v892 = vadd.f32 %v773, %v891
  %v893 = vpop.f32.mrb[0].mxu0
  %894 = vmatprep.mubr.bf16.mxu0 0
  %895 = vmatmul.mubr.bf16.gmra.mrb[0].mxu0 %v795
  %v896 = vpop.f32.mrb[0].mxu0
  %v897 = vadd.f32 %v773, %v896
  %v898 = vpop.f32.mrb[0].mxu0
  %v899 = vpop.f32.mrb[0].mxu0
  %v900 = vadd.f32 %v773, %v899
  %v901 = vpop.f32.mrb[0].mxu0
  %902 = vmatprep.mubr.bf16.mxu0 0
  %903 = vmatmul.mubr.bf16.gmra.mrb[0].mxu0 %v798
  %v904 = vpop.f32.mrb[0].mxu0
  %v905 = vadd.f32 %v773, %v904
  %v906 = vpop.f32.mrb[0].mxu0
  %v907 = vpop.f32.mrb[0].mxu0
  %v908 = vadd.f32 %v773, %v907
  %v909 = vpop.f32.mrb[0].mxu0
  %910 = vmatprep.mubr.bf16.mxu0 0
  %911 = vmatmul.mubr.bf16.gmra.mrb[0].mxu0 %v801
  %v912 = vpop.f32.mrb[0].mxu0
  %v913 = vadd.f32 %v773, %v912
  %v914 = vpop.f32.mrb[0].mxu0
  %v915 = vpop.f32.mrb[0].mxu0
  %v916 = vadd.f32 %v773, %v915
  %v917 = vpop.f32.mrb[0].mxu0
  %918 = vmatprep.mubr.bf16.mxu0 0
  %919 = vmatmul.mubr.bf16.gmra.mrb[0].mxu0 %v804
  %v920 = vpop.f32.mrb[0].mxu0
  %v921 = vadd.f32 %v773, %v920
  %v922 = vpop.f32.mrb[0].mxu0
  %v923 = vpop.f32.mrb[0].mxu0
  %v924 = vadd.f32 %v773, %v923
  %v925 = vpop.f32.mrb[0].mxu0
  %926 = vmatprep.mubr.bf16.mxu0 0
  %927 = vmatmul.mubr.bf16.gmra.mrb[0].mxu0 %v807
  %v928 = vpop.f32.mrb[0].mxu0
  %v929 = vadd.f32 %v773, %v928
  %v930 = vpop.f32.mrb[0].mxu0
  %v931 = vpop.f32.mrb[0].mxu0
  %v932 = vadd.f32 %v773, %v931
  %v933 = vpop.f32.mrb[0].mxu0
  %934 = vmatprep.mubr.bf16.mxu0 0
  %935 = vmatmul.mubr.bf16.gmra.mrb[0].mxu0 %v810
  %v936 = vpop.f32.mrb[0].mxu0
  %v937 = vadd.f32 %v773, %v936
  %v938 = vpop.f32.mrb[0].mxu0
  %v939 = vpop.f32.mrb[0].mxu0
  %v940 = vadd.f32 %v773, %v939
  %v941 = vpop.f32.mrb[0].mxu0
  %942 = vmatprep.mubr.bf16.mxu0 0
  %943 = vmatmul.mubr.bf16.gmra.mrb[0].mxu0 %v813
  %v944 = vpop.f32.mrb[0].mxu0
  %v945 = vadd.f32 %v773, %v944
  %v946 = vpop.f32.mrb[0].mxu0
  %v947 = vpop.f32.mrb[0].mxu0
  %v948 = vadd.f32 %v773, %v947
  %v949 = vpop.f32.mrb[0].mxu0
  %950 = vmatprep.mubr.bf16.mxu0 0
  %951 = vmatmul.mubr.bf16.gmra.mrb[0].mxu0 %v816
  %v952 = vpop.f32.mrb[0].mxu0
  %v953 = vadd.f32 %v773, %v952
  %v954 = vpop.f32.mrb[0].mxu0
  %v955 = vpop.f32.mrb[0].mxu0
  %v956 = vadd.f32 %v773, %v955
  %v957 = vpop.f32.mrb[0].mxu0
  %958 = vmatprep.mubr.bf16.mxu0 0
  %959 = vmatmul.mubr.bf16.gmra.mrb[0].mxu0 %v819
  %v960 = vpop.f32.mrb[0].mxu0
  %v961 = vadd.f32 %v773, %v960
  %v962 = vpop.f32.mrb[0].mxu0
  %v963 = vpop.f32.mrb[0].mxu0
  %v964 = vadd.f32 %v773, %v963
  %v965 = vpop.f32.mrb[0].mxu0
  %966 = vmatprep.mubr.bf16.mxu0 0
  %967 = vmatmul.mubr.bf16.gmra.mrb[0].mxu0 %v822
  %v968 = vpop.f32.mrb[0].mxu0
  %v969 = vadd.f32 %v773, %v968
  %v970 = vpop.f32.mrb[0].mxu0
  %v971 = vpop.f32.mrb[0].mxu0
  %v972 = vadd.f32 %v773, %v971
  %v973 = vpop.f32.mrb[0].mxu0
  %974 = vmatprep.mubr.bf16.mxu0 0
  %975 = vmatmul.mubr.bf16.gmra.mrb[0].mxu0 %v825
  %v976 = vpop.f32.mrb[0].mxu0
  %v977 = vadd.f32 %v773, %v976
  %v978 = vpop.f32.mrb[0].mxu0
  %v979 = vpop.f32.mrb[0].mxu0
  %v980 = vadd.f32 %v773, %v979
  %v981 = vpop.f32.mrb[0].mxu0
  %982 = vmatprep.mubr.bf16.mxu0 0
  %983 = vmatmul.mubr.bf16.gmra.mrb[0].mxu0 %v828
  %v984 = vpop.f32.mrb[0].mxu0
  %v985 = vadd.f32 %v773, %v984
  %v986 = vpop.f32.mrb[0].mxu0
  %v987 = vpop.f32.mrb[0].mxu0
  %v988 = vadd.f32 %v773, %v987
  %v989 = vpop.f32.mrb[0].mxu0
  %990 = vdwg.mxu0
  %vm991 = vcmask 7168
  %992 = vst.msk [vmem:[%s5] sm:$0xff] %vm991, %v865
  %993 = vst.msk [vmem:[%s5 + $0x8] sm:$0xff] %vm991, %v868
  %994 = vst.msk [vmem:[%s5 + $0x10] sm:$0xff] %vm991, %v873
  %995 = vst.msk [vmem:[%s5 + $0x18] sm:$0xff] %vm991, %v876
  %996 = vst.msk [vmem:[%s5 + $0x20] sm:$0xff] %vm991, %v881
  %997 = vst.msk [vmem:[%s5 + $0x28] sm:$0xff] %vm991, %v884
  %998 = vst.msk [vmem:[%s5 + $0x30] sm:$0xff] %vm991, %v889
  %999 = vst.msk [vmem:[%s5 + $0x38] sm:$0xff] %vm991, %v892
  %1000 = vst.msk [vmem:[%s5 + $0x40] sm:$0xff] %vm991, %v897
  %1001 = vst.msk [vmem:[%s5 + $0x48] sm:$0xff] %vm991, %v900
  %1002 = vst.msk [vmem:[%s5 + $0x50] sm:$0xff] %vm991, %v905
  %1003 = vst.msk [vmem:[%s5 + $0x58] sm:$0xff] %vm991, %v908
  %1004 = vst.msk [vmem:[%s5 + $0x60] sm:$0xff] %vm991, %v913
  %1005 = vst.msk [vmem:[%s5 + $0x68] sm:$0xff] %vm991, %v916
  %1006 = vst.msk [vmem:[%s5 + $0x70] sm:$0xff] %vm991, %v921
  %1007 = vst.msk [vmem:[%s5 + $0x78] sm:$0xff] %vm991, %v924
  %1008 = vst.msk [vmem:[%s5 + $0x80] sm:$0xff] %vm991, %v929
  %1009 = vst.msk [vmem:[%s5 + $0x88] sm:$0xff] %vm991, %v932
  %1010 = vst.msk [vmem:[%s5 + $0x90] sm:$0xff] %vm991, %v937
  %1011 = vst.msk [vmem:[%s5 + $0x98] sm:$0xff] %vm991, %v940
  %1012 = vst.msk [vmem:[%s5 + $0xa0] sm:$0xff] %vm991, %v945
  %1013 = vst.msk [vmem:[%s5 + $0xa8] sm:$0xff] %vm991, %v948
  %1014 = vst.msk [vmem:[%s5 + $0xb0] sm:$0xff] %vm991, %v953
  %1015 = vst.msk [vmem:[%s5 + $0xb8] sm:$0xff] %vm991, %v956
  %1016 = vst.msk [vmem:[%s5 + $0xc0] sm:$0xff] %vm991, %v961
  %1017 = vst.msk [vmem:[%s5 + $0xc8] sm:$0xff] %vm991, %v964
  %1018 = vst.msk [vmem:[%s5 + $0xd0] sm:$0xff] %vm991, %v969
  %1019 = vst.msk [vmem:[%s5 + $0xd8] sm:$0xff] %vm991, %v972
  %1020 = vst.msk [vmem:[%s5 + $0xe0] sm:$0xff] %vm991, %v977
  %1021 = vst.msk [vmem:[%s5 + $0xe8] sm:$0xff] %vm991, %v980
  %1022 = vst.msk [vmem:[%s5 + $0xf0] sm:$0xff] %vm991, %v985
  %1023 = vst.msk [vmem:[%s5 + $0xf8] sm:$0xff] %vm991, %v988
  // Predicated region
  $region22: #{attn_net_gated_forward.1} parent=0 // pred_check
    _
  $region23: #{attn_net_gated_forward.1} parent=0 // pred_check_branch
    %1025 = sbr.rel (0) target = $region25
  $region24: #{attn_net_gated_forward.1} parent=0 // pred_region
    _
  $region25: #{attn_net_gated_forward.1} parent=0 // pred_fallthru
    _
  // Predicated region
  $region26: #{attn_net_gated_forward.1} parent=0 // pred_check
    _
  $region27: #{attn_net_gated_forward.1} parent=0 // pred_check_branch
    %1027 = sbr.rel (0) target = $region29
  $region28: #{attn_net_gated_forward.1} parent=0 // pred_region
    _
  $region29: #{attn_net_gated_forward.1} parent=0 // pred_fallthru
    _

</llo_original>
